<compile_context>
chip_gen: v6e
topology: v6e:2x2x1
jax: 0.10.0
libtpu: 0.0.40
codegen_flags: <defaults>
</compile_context>

<pallas_src>
import jax
import jax.numpy as jnp
from jax.experimental import pallas as pl
from jax.experimental.pallas import tpu as pltpu


def _focal_bce_sum_kernel(n_ref, x_ref, t_ref, out_ref, acc_ref):
    """Accumulate sum of per-element BCE-with-logits terms over the grid."""
    p = pl.program_id(0)           # parallel slice (megacore split on v7x)
    k = pl.program_id(1)           # reduction step ("arbitrary")
    k_steps = pl.num_programs(1)

    block_rows, lane_width = x_ref.shape  # static Python ints

    @pl.when(k == 0)
    def _init():
        acc_ref[...] = jnp.zeros_like(acc_ref)

    # Upcast in-kernel; wrapper passes the native dtype.
    x = x_ref[...].astype(jnp.float32)
    t = t_ref[...].astype(jnp.float32)

    # Numerically stable BCE with logits:
    #   bce = max(x, 0) - x*t + log(1 + exp(-|x|))
    bce = jnp.maximum(x, 0.0) - x * t + jnp.log1p(jnp.exp(-jnp.abs(x)))

    # Exact masking of the zero-padded tail (no sentinel values).
    row_iota = jax.lax.broadcasted_iota(jnp.int32, (block_rows, lane_width), 0)
    col_iota = jax.lax.broadcasted_iota(jnp.int32, (block_rows, lane_width), 1)
    row_base = (p * k_steps + k) * block_rows
    global_idx = (row_base + row_iota) * lane_width + col_iota
    bce = jnp.where(global_idx < n_ref[0], bce, 0.0)

    # Vector accumulate in VMEM: no cross-lane / scalar work in the hot loop.
    acc_ref[...] += bce

    @pl.when(k == k_steps - 1)
    def _finalize():
        total = jnp.sum(acc_ref[...])   # single cross-lane reduce, once
        out_ref[...] = jnp.full(out_ref.shape, total, dtype=out_ref.dtype)


def focal_loss(inputs, targets, gamma=2.0, *, block_rows=256, lane_width=1024):
    """Pallas implementation of FocalLoss.forward (returns a float32 scalar)."""
    assert inputs.shape == targets.shape

    x = jnp.ravel(inputs)
    t = jnp.ravel(targets)
    n = x.shape[0]

    if n == 0:
        # torch: mean over an empty tensor -> nan; focal of nan stays nan.
        return jnp.float32(jnp.nan)

    w = lane_width
    rows_needed = -(-n // w)                    # ceil(n / w)
    if rows_needed <= block_rows:
        block_rows = rows_needed                # single full-array block
        nblocks = 1
    else:
        nblocks = -(-rows_needed // block_rows)
    rows = nblocks * block_rows
    n_pad = rows * w
    if n_pad != n:
        x = jnp.pad(x, (0, n_pad - n))          # zeros; masked inside kernel
        t = jnp.pad(t, (0, n_pad - n))
    x2 = x.reshape(rows, w)
    t2 = t.reshape(rows, w)

    # Split the reduction into two parallel slices when possible so both v7x
    # TensorCores stream HBM concurrently (harmless on single-TC v5e/v6e).
    num_par = 2 if (nblocks >= 2 and nblocks % 2 == 0) else 1
    k_steps = nblocks // num_par

    n_arr = jnp.asarray([n], dtype=jnp.int32)   # scalar-prefetched valid count

    partials = pl.pallas_call(
        _focal_bce_sum_kernel,
        out_shape=jax.ShapeDtypeStruct((num_par, 8, 128), jnp.float32),
        grid_spec=pltpu.PrefetchScalarGridSpec(
            num_scalar_prefetch=1,
            grid=(num_par, k_steps),
            in_specs=[
                pl.BlockSpec((block_rows, w), lambda p, k, n_s: (p * k_steps + k, 0)),
                pl.BlockSpec((block_rows, w), lambda p, k, n_s: (p * k_steps + k, 0)),
            ],
            out_specs=pl.BlockSpec((1, 8, 128), lambda p, k, n_s: (p, 0, 0)),
            scratch_shapes=[pltpu.VMEM((block_rows, w), jnp.float32)],
        ),
        compiler_params=pltpu.CompilerParams(
            dimension_semantics=("parallel", "arbitrary"),
        ),
    )(n_arr, x2, t2)

    # Combine per-slice partial sums and apply the (scalar) focal formula.
    bce_sum = jnp.sum(partials[:, 0, 0])
    mean_bce = bce_sum / jnp.float32(n)
    gamma = jnp.float32(gamma)
    return (1.0 - jnp.exp(-mean_bce)) ** gamma * mean_bce


def focal_loss_ref(inputs, targets, gamma=2.0):
    """Pure-JAX reference mirroring the PyTorch forward."""
    x = jnp.ravel(inputs).astype(jnp.float32)
    t = jnp.ravel(targets).astype(jnp.float32)
    bce = jnp.mean(jnp.maximum(x, 0.0) - x * t + jnp.log1p(jnp.exp(-jnp.abs(x))))
    return (1.0 - jnp.exp(-bce)) ** gamma * bce


if __name__ == "__main__":
    key = jax.random.PRNGKey(0)
    k1, k2, k3, k4 = jax.random.split(key, 4)

    # Segmentation-style shapes: batch=2, channels=4, spatial=16x16 (NCHW).
    inputs = jax.random.normal(k1, (2, 4, 16, 16), dtype=jnp.float32)
    targets = (jax.random.uniform(k2, (2, 4, 16, 16)) > 0.5).astype(jnp.float32)

    loss = jax.block_until_ready(focal_loss(inputs, targets, gamma=2.0))
    ref = focal_loss_ref(inputs, targets, gamma=2.0)
    assert jnp.allclose(loss, ref, rtol=1e-5, atol=1e-5), (loss, ref)

    # Odd-sized input exercises the in-kernel tail masking path.
    inputs2 = jax.random.normal(k3, (2, 3, 15, 17), dtype=jnp.float32)
    targets2 = (jax.random.uniform(k4, (2, 3, 15, 17)) > 0.5).astype(jnp.float32)

    loss2 = jax.block_until_ready(focal_loss(inputs2, targets2, gamma=2.0))
    ref2 = focal_loss_ref(inputs2, targets2, gamma=2.0)
    assert jnp.allclose(loss2, ref2, rtol=1e-5, atol=1e-5), (loss2, ref2)

    print("KERNEL_OK")
</pallas_src>

<mosaic_0001>
module attributes {stable_mosaic.version = 11 : i64} {
  func.func @_focal_bce_sum_kernel(%arg0: i32, %arg1: i32, %arg2: memref<1xi32, #tpu.memory_space<smem>>, %arg3: memref<2x1024xf32, #tpu.memory_space<vmem>>, %arg4: memref<2x1024xf32, #tpu.memory_space<vmem>>, %arg5: memref<1x8x128xf32, #tpu.memory_space<vmem>>, %arg6: memref<2x1024xf32, #tpu.memory_space<vmem>>) attributes {dimension_semantics = [#tpu.dimension_semantics<parallel>, #tpu.dimension_semantics<arbitrary>], iteration_bounds = array<i64: 1, 1>, scalar_prefetch = 1 : i64, scratch_operands = 1 : i64, tpu.core_type = #tpu.core_type<tc>, window_params = [{transform_indices = @transform_0, window_bounds = array<i64: 2, 1024>}, {transform_indices = @transform_1, window_bounds = array<i64: 2, 1024>}, {transform_indices = @transform_2, window_bounds = array<i64: 1, 8, 128>}]} {
    %c0_i32 = arith.constant 0 : i32
    %0 = arith.cmpi eq, %arg1, %c0_i32 : i32
    %1 = arith.extui %0 : i1 to i32
    %c0_i32_0 = arith.constant 0 : i32
    %2 = arith.cmpi ne, %1, %c0_i32_0 : i32
    scf.if %2 {
      %cst_13 = arith.constant 0.000000e+00 : f32
      %36 = vector.broadcast %cst_13 : f32 to vector<2x1024xf32>
      %c0_14 = arith.constant 0 : index
      %c0_15 = arith.constant 0 : index
      %37 = vector.load %arg6[%c0_14, %c0_15] : memref<2x1024xf32, #tpu.memory_space<vmem>>, vector<2x1024xf32>
      tpu.vector_store %arg6[%c0_14, %c0_15], %36 {strides = array<i32>} : memref<2x1024xf32, #tpu.memory_space<vmem>>, vector<2x1024xf32>,
    } else {
    }
    %c0 = arith.constant 0 : index
    %c0_1 = arith.constant 0 : index
    %3 = vector.load %arg3[%c0, %c0_1] : memref<2x1024xf32, #tpu.memory_space<vmem>>, vector<2x1024xf32>
    %c0_2 = arith.constant 0 : index
    %c0_3 = arith.constant 0 : index
    %4 = vector.load %arg4[%c0_2, %c0_3] : memref<2x1024xf32, #tpu.memory_space<vmem>>, vector<2x1024xf32>
    %cst = arith.constant 0.000000e+00 : f32
    %5 = vector.broadcast %cst : f32 to vector<2x1024xf32>
    %6 = arith.maximumf %3, %5 : vector<2x1024xf32>
    %7 = arith.mulf %3, %4 : vector<2x1024xf32>
    %8 = arith.subf %6, %7 : vector<2x1024xf32>
    %9 = math.absf %3 : vector<2x1024xf32>
    %cst_4 = arith.constant 0.000000e+00 : f32
    %10 = vector.broadcast %cst_4 : f32 to vector<2x1024xf32>
    %11 = arith.subf %10, %9 : vector<2x1024xf32>
    %12 = math.exp %11 : vector<2x1024xf32>
    %13 = math.log1p %12 : vector<2x1024xf32>
    %14 = arith.addf %8, %13 : vector<2x1024xf32>
    %15 = tpu.iota {dimensions = array<i32: 0>} : vector<2x1024xi32>
    %16 = tpu.iota {dimensions = array<i32: 1>} : vector<2x1024xi32>
    %c1_i32 = arith.constant 1 : i32
    %17 = arith.muli %arg0, %c1_i32 : i32
    %18 = arith.addi %17, %arg1 : i32
    %c2_i32 = arith.constant 2 : i32
    %19 = arith.muli %18, %c2_i32 : i32
    %20 = vector.broadcast %19 : i32 to vector<2x1024xi32>
    %21 = arith.addi %20, %15 : vector<2x1024xi32>
    %c1024_i32 = arith.constant 1024 : i32
    %22 = vector.broadcast %c1024_i32 : i32 to vector<2x1024xi32>
    %23 = arith.muli %21, %22 : vector<2x1024xi32>
    %24 = arith.addi %23, %16 : vector<2x1024xi32>
    %c0_5 = arith.constant 0 : index
    %25 = memref.load %arg2[%c0_5] : memref<1xi32, #tpu.memory_space<smem>>
    %26 = vector.broadcast %25 : i32 to vector<2x1024xi32>
    %27 = arith.cmpi slt, %24, %26 : vector<2x1024xi32>
    %cst_6 = arith.constant 0.000000e+00 : f32
    %28 = vector.broadcast %cst_6 : f32 to vector<2x1024xf32>
    %29 = arith.select %27, %14, %28 : vector<2x1024xi1>, vector<2x1024xf32>
    %c0_7 = arith.constant 0 : index
    %c0_8 = arith.constant 0 : index
    %30 = vector.load %arg6[%c0_7, %c0_8] : memref<2x1024xf32, #tpu.memory_space<vmem>>, vector<2x1024xf32>
    %31 = arith.addf %30, %29 : vector<2x1024xf32>
    %c0_9 = arith.constant 0 : index
    %c0_10 = arith.constant 0 : index
    %32 = vector.load %arg6[%c0_9, %c0_10] : memref<2x1024xf32, #tpu.memory_space<vmem>>, vector<2x1024xf32>
    tpu.vector_store %arg6[%c0_9, %c0_10], %31 {strides = array<i32>} : memref<2x1024xf32, #tpu.memory_space<vmem>>, vector<2x1024xf32>,
    %c0_i32_11 = arith.constant 0 : i32
    %33 = arith.cmpi eq, %arg1, %c0_i32_11 : i32
    %34 = arith.extui %33 : i1 to i32
    %c0_i32_12 = arith.constant 0 : i32
    %35 = arith.cmpi ne, %34, %c0_i32_12 : i32
    scf.if %35 {
      %c0_13 = arith.constant 0 : index
      %c0_14 = arith.constant 0 : index
      %36 = vector.load %arg6[%c0_13, %c0_14] : memref<2x1024xf32, #tpu.memory_space<vmem>>, vector<2x1024xf32>
      %37 = vector.shape_cast %36 : vector<2x1024xf32> to vector<1x2x1024xf32>
      %cst_15 = arith.constant dense<0.000000e+00> : vector<1xf32>
      %38 = vector.multi_reduction <add>, %37, %cst_15 [1, 2] : vector<1x2x1024xf32> to vector<1xf32>
      %39 = vector.shape_cast %38 : vector<1xf32> to vector<1x1x1xf32>
      %40 = vector.extract %39[0, 0, 0] : f32 from vector<1x1x1xf32>
      %41 = vector.broadcast %40 : f32 to vector<1x8x128xf32>
      %c0_16 = arith.constant 0 : index
      %c0_17 = arith.constant 0 : index
      %c0_18 = arith.constant 0 : index
      %42 = vector.load %arg5[%c0_16, %c0_17, %c0_18] : memref<1x8x128xf32, #tpu.memory_space<vmem>>, vector<1x8x128xf32>
      tpu.vector_store %arg5[%c0_16, %c0_17, %c0_18], %41 {strides = array<i32>} : memref<1x8x128xf32, #tpu.memory_space<vmem>>, vector<1x8x128xf32>,
    } else {
    }
    return
  }
  func.func @transform_0(%arg0: i32, %arg1: i32, %arg2: memref<1xi32, #tpu.memory_space<smem>>) -> (i32, i32) {
    %c1_i32 = arith.constant 1 : i32
    %0 = arith.muli %arg0, %c1_i32 : i32
    %1 = arith.addi %0, %arg1 : i32
    %c0_i32 = arith.constant 0 : i32
    %c0_i32_0 = arith.constant 0 : i32
    return %1, %c0_i32 : i32, i32
  }
  func.func @transform_1(%arg0: i32, %arg1: i32, %arg2: memref<1xi32, #tpu.memory_space<smem>>) -> (i32, i32) {
    %c1_i32 = arith.constant 1 : i32
    %0 = arith.muli %arg0, %c1_i32 : i32
    %1 = arith.addi %0, %arg1 : i32
    %c0_i32 = arith.constant 0 : i32
    %c0_i32_0 = arith.constant 0 : i32
    return %1, %c0_i32 : i32, i32
  }
  func.func @transform_2(%arg0: i32, %arg1: i32, %arg2: memref<1xi32, #tpu.memory_space<smem>>) -> (i32, i32, i32) {
    %c0_i32 = arith.constant 0 : i32
    %c0_i32_0 = arith.constant 0 : i32
    %c0_i32_1 = arith.constant 0 : i32
    return %arg0, %c0_i32, %c0_i32_0 : i32, i32, i32
  }
}

</mosaic_0001>

<llo_original>
// kernel: tpu_custom_call.1
$region0: #{tpu_custom_call.1}
  #allocation0 [shape = 'u32[]', space=smem, size = 0x4, offset = 0x4, fixed_abs, tag = 'smem constant byte address 0x4 - core index']
  #allocation1 [shape = 'u32[144,128]{1,0:T(1,128)}', space=vmem, size = 0x12000, scoped, tag = 'internal scratch']
  #allocation2 [shape = 'f32[2,1024]{1,0:T(2,128)}', space=vmem, size = 0x2000, scoped, tag = 'scratch operand']
  #allocation3 [shape = 's32[1]{0}', space=sflag, size = 0x4, scoped, tag = 'scoped memory for tpu_custom_call.1']
  #allocation4 [shape = 's32[1]{0:T(128)S(6)}', space=smem, size = 0x200, scoped, tag = 'prefetched SMEM operand 0']
  %s0 = inlined_call_operand.<no memory space> [shape: s32[1], index: 0, kind: input, shape index: {}]
  %s1 = inlined_call_operand.hbm [shape: f32[2,1024], index: 1, kind: input, shape index: {}]
  %s2 = inlined_call_operand.hbm [shape: f32[2,1024], index: 2, kind: input, shape index: {}]
  %s3 = inlined_call_operand.hbm [shape: f32[1,8,128], index: 3, kind: output, shape index: {}]
  %s4 = sld [smem:[#allocation0]]
  $region34: #{tpu_custom_call.1} parent=0
    _
  %s6 = ssub.s32 1, %s4
  %s7 = scalar_select 0, %s6, %s4
  %8 = sst [smem:[#allocation4]] %s0
  $region1: #{tpu_custom_call.1} parent=0
    #allocation5 [shape = 'u8[8192]{0}', space=vmem, size = 0x2000, scoped, tag = 'input window, operand 1, single buffered']
    #allocation6 [shape = 's32[1]{0}', space=sflag, size = 0x4, scoped, tag = 'scoped memory for tpu_custom_call.1']
    #allocation7 [shape = 's32[1]{0}', space=sflag, size = 0x4, scoped, tag = 'scoped memory for tpu_custom_call.1']
    #allocation8 [shape = 'u8[8192]{0}', space=vmem, size = 0x2000, scoped, tag = 'input window, operand 2, single buffered']
    #allocation9 [shape = 's32[1]{0}', space=sflag, size = 0x4, scoped, tag = 'scoped memory for tpu_custom_call.1']
    #allocation10 [shape = 'u8[4096]{0}', space=vmem, size = 0x1000, scoped, tag = 'output window, operand 0, single buffered']
    %9 = vsyncpa [#allocation6], 0
    %10 = vsyncpa [#allocation9], 0
    %11 = vsyncpa [#allocation7], 0
    // Predicated region
    $region2: #{tpu_custom_call.1} parent=1 // pred_check
      _
    $region3: #{tpu_custom_call.1} parent=1 // pred_check_branch
      %13 = sbr.rel (0) target = $region5
    $region4: #{tpu_custom_call.1} parent=1 // pred_region
      %s14 = sadd.s32 0, 0
      %s16 = ssub.s32 256, 256
      %17 = vsyncadd [#allocation6], %s16
      %s18 = smul.addr %s14, 8
      %s19 = smul.addr %s18, 32
      %s20 = scalar_lea.hbm %s1, %s19
      %s22 = sshll.u32 [#allocation5], 4
      %s23 = int_to_ptr.vmem [resolvable:$true] %s22
      %25 = dma.hbm_to_vmem [thread:$0]  %s20, 256, %s23, [#allocation6]
    $region5: #{tpu_custom_call.1} parent=1 // pred_fallthru
      _
    // Predicated region
    $region6: #{tpu_custom_call.1} parent=1 // pred_check
      _
    $region7: #{tpu_custom_call.1} parent=1 // pred_check_branch
      %27 = sbr.rel (0) target = $region9
    $region8: #{tpu_custom_call.1} parent=1 // pred_region
      %s28 = sadd.s32 0, 0
      %s30 = ssub.s32 256, 256
      %31 = vsyncadd [#allocation9], %s30
      %s32 = smul.addr %s28, 8
      %s33 = smul.addr %s32, 32
      %s34 = scalar_lea.hbm %s2, %s33
      %s36 = sshll.u32 [#allocation8], 4
      %s37 = int_to_ptr.vmem [resolvable:$true] %s36
      %39 = dma.hbm_to_vmem [thread:$0]  %s34, 256, %s37, [#allocation9]
    $region9: #{tpu_custom_call.1} parent=1 // pred_fallthru
      _
    // Predicated region
    $region10: #{tpu_custom_call.1} parent=1 // pred_check
      _
    $region11: #{tpu_custom_call.1} parent=1 // pred_check_branch
      %41 = sbr.rel (0) target = $region13
    $region12: #{tpu_custom_call.1} parent=1 // pred_region
      %42 = dma.done [#allocation6], 256
    $region13: #{tpu_custom_call.1} parent=1 // pred_fallthru
      _
    // Predicated region
    $region14: #{tpu_custom_call.1} parent=1 // pred_check
      _
    $region15: #{tpu_custom_call.1} parent=1 // pred_check_branch
      %44 = sbr.rel (0) target = $region17
    $region16: #{tpu_custom_call.1} parent=1 // pred_region
      %45 = dma.done [#allocation9], 256
    $region17: #{tpu_custom_call.1} parent=1 // pred_fallthru
      _
    %s46 = sadd.s32 0, 0
    %s47 = sadd.s32 0, 0
    %p48 = scmp.eq.s32.totalorder 0, 0
    // Predicated region
    $region18: #{tpu_custom_call.1} parent=1 // pred_check
      %p49 = pneg %p48
    $region19: #{tpu_custom_call.1} parent=1 // pred_check_branch
      %51 = sbr.rel (%p49) target = $region21
    $region20: #{tpu_custom_call.1} parent=1 // pred_region
      %52 = vst [vmem:[#allocation2] sm:$0xff] 0.0
      %53 = vst [vmem:[#allocation2 + $0x8] sm:$0xff] 0.0
    $region21: #{tpu_custom_call.1} parent=1 // pred_fallthru
      _
    %v54 = vld [vmem:[#allocation5] sm:$0xff]
    %v55 = vld [vmem:[#allocation5 + $0x8] sm:$0xff]
    %v56 = vld [vmem:[#allocation8] sm:$0xff]
    %v57 = vld [vmem:[#allocation8 + $0x8] sm:$0xff]
    %v58 = vmax.f32 %v54, 0.0
    %v59 = vmax.f32 %v55, 0.0
    %v60 = vmul.f32 %v54, %v56
    %v61 = vmul.f32 %v55, %v57
    %v62 = vsub.f32 %v58, %v60
    %v63 = vsub.f32 %v59, %v61
    %v64 = vand.u32 2147483647, %v54
    %v65 = vand.u32 2147483647, %v55
    %v66 = vsub.f32 0.0, %v64
    %v67 = vsub.f32 0.0, %v65
    %v68 = vmul.f32 %v66, 1.442695
    %v69 = vpow.pop %v68
    %v70 = vmul.f32 %v67, 1.442695
    %v71 = vpow.pop %v70
    %v72 = vadd.f32 %v69, 1.0
    %v73 = vlog2.pop %v72
    %v74 = vmul.f32 %v73, 0.6931472
    %v75 = vmul.f32 -0.5, %v69
    %v76 = vadd.f32 %v75, 1.0
    %v77 = vmul.f32 %v76, %v69
    %v78 = vand.u32 2147483647, %v69
    %vm79 = vcmp.lt.f32.partialorder %v78, 0.0004427343
    %v80 = vsel %vm79, %v77, %v74
    %v81 = vadd.f32 %v71, 1.0
    %v82 = vlog2.pop %v81
    %v83 = vmul.f32 %v82, 0.6931472
    %v84 = vmul.f32 -0.5, %v71
    %v85 = vadd.f32 %v84, 1.0
    %v86 = vmul.f32 %v85, %v71
    %v87 = vand.u32 2147483647, %v71
    %vm88 = vcmp.lt.f32.partialorder %v87, 0.0004427343
    %v89 = vsel %vm88, %v86, %v83
    %v90 = vadd.f32 %v62, %v80
    %v91 = vadd.f32 %v63, %v89
    %v92 = vlaneseq
    %v93 = vshrl.u32 %v92, 7
    %v94 = vlaneseq
    %v95 = vand.u32 %v94, 127
    %v96 = vadd.s32 %v95, 128
    %v97 = vadd.s32 %v95, 256
    %v98 = vadd.s32 %v95, 384
    %v99 = vadd.s32 %v95, 512
    %v100 = vadd.s32 %v95, 640
    %v101 = vadd.s32 %v95, 768
    %v102 = vadd.s32 %v95, 896
    %s103 = sadd.s32 0, 0
    %s104 = smul.u32 %s103, 2
    %v105 = vstv %s104
    %v106 = vadd.s32 %v105, %v93
    %v107 = vmul.u32 %v106, 1024
    %v108 = vadd.s32 %v107, %v95
    %v109 = vadd.s32 %v107, %v96
    %v110 = vadd.s32 %v107, %v97
    %v111 = vadd.s32 %v107, %v98
    %v112 = vadd.s32 %v107, %v99
    %v113 = vadd.s32 %v107, %v100
    %v114 = vadd.s32 %v107, %v101
    %v115 = vadd.s32 %v107, %v102
    %s116 = sld [smem:[#allocation4]]
    %v117 = vstv %s116
    %vm118 = vcmp.lt.s32.totalorder %v108, %v117
    %vm119 = vcmp.lt.s32.totalorder %v109, %v117
    %vm120 = vcmp.lt.s32.totalorder %v110, %v117
    %vm121 = vcmp.lt.s32.totalorder %v111, %v117
    %vm122 = vcmp.lt.s32.totalorder %v112, %v117
    %vm123 = vcmp.lt.s32.totalorder %v113, %v117
    %vm124 = vcmp.lt.s32.totalorder %v114, %v117
    %vm125 = vcmp.lt.s32.totalorder %v115, %v117
    %v128 = vcombine.high %v90, %v90
    %v130 = vunpack.c.l.s4 1983009808
    %v131 = vunpack.c.0.s8 %v130
    %v132 = vlaneseq
    %v133 = vshrl.u32 %v132, 7
    %v134 = vsub.s32 %v131, %v133
    %v135 = vrot.slane %v90, %v134
    %v137 = vunpack.c.l.s4 1983009808
    %v138 = vunpack.c.0.s8 %v137
    %v139 = vlaneseq
    %v140 = vshrl.u32 %v139, 7
    %v141 = vsub.s32 %v138, %v140
    %v142 = vrot.slane %v128, %v141
    %v143 = vcombine.high %v135, %v135
    %v144 = vcombine.high %v142, %v142
    %v145 = vcombine.high %v91, %v91
    %v147 = vunpack.c.l.s4 1983009808
    %v148 = vunpack.c.0.s8 %v147
    %v149 = vlaneseq
    %v150 = vshrl.u32 %v149, 7
    %v151 = vsub.s32 %v148, %v150
    %v152 = vrot.slane %v91, %v151
    %v154 = vunpack.c.l.s4 1983009808
    %v155 = vunpack.c.0.s8 %v154
    %v156 = vlaneseq
    %v157 = vshrl.u32 %v156, 7
    %v158 = vsub.s32 %v155, %v157
    %v159 = vrot.slane %v145, %v158
    %v160 = vcombine.high %v152, %v152
    %v161 = vcombine.high %v159, %v159
    %v170 = vsel %vm118, %v135, 0.0
    %v171 = vsel %vm119, %v143, 0.0
    %v172 = vsel %vm120, %v142, 0.0
    %v173 = vsel %vm121, %v144, 0.0
    %v174 = vsel %vm122, %v152, 0.0
    %v175 = vsel %vm123, %v160, 0.0
    %v176 = vsel %vm124, %v159, 0.0
    %v177 = vsel %vm125, %v161, 0.0
    %v178 = vld [vmem:[#allocation2] sm:$0xff]
    %v179 = vld [vmem:[#allocation2 + $0x8] sm:$0xff]
    %v188 = vcombine.low %v170, %v171
    %v189 = vcombine.low %v172, %v173
    %v191 = vunpack.c.l.s4 1983009808
    %v192 = vunpack.c.0.s8 %v191
    %v193 = vlaneseq
    %v194 = vshrl.u32 %v193, 7
    %v195 = vsub.s32 %v192, %v194
    %v196 = vrot.slane %v188, %v195
    %v198 = vunpack.c.l.s4 1983009808
    %v199 = vunpack.c.0.s8 %v198
    %v200 = vlaneseq
    %v201 = vshrl.u32 %v200, 7
    %v202 = vsub.s32 %v199, %v201
    %v203 = vrot.slane %v189, %v202
    %v204 = vcombine.low %v196, %v203
    %v205 = vcombine.low %v174, %v175
    %v206 = vcombine.low %v176, %v177
    %v208 = vunpack.c.l.s4 1983009808
    %v209 = vunpack.c.0.s8 %v208
    %v210 = vlaneseq
    %v211 = vshrl.u32 %v210, 7
    %v212 = vsub.s32 %v209, %v211
    %v213 = vrot.slane %v205, %v212
    %v215 = vunpack.c.l.s4 1983009808
    %v216 = vunpack.c.0.s8 %v215
    %v217 = vlaneseq
    %v218 = vshrl.u32 %v217, 7
    %v219 = vsub.s32 %v216, %v218
    %v220 = vrot.slane %v206, %v219
    %v221 = vcombine.low %v213, %v220
    %v224 = vadd.f32 %v178, %v204
    %v225 = vadd.f32 %v179, %v221
    %226 = vst [vmem:[#allocation2] sm:$0xff] %v224
    %227 = vst [vmem:[#allocation2 + $0x8] sm:$0xff] %v225
    // Predicated region
    $region22: #{tpu_custom_call.1} parent=1 // pred_check
      %p228 = pneg %p48
    $region23: #{tpu_custom_call.1} parent=1 // pred_check_branch
      %230 = sbr.rel (%p228) target = $region25
    $region24: #{tpu_custom_call.1} parent=1 // pred_region
      %v231 = vld [vmem:[#allocation2] sm:$0xff]
      %v232 = vld [vmem:[#allocation2 + $0x8] sm:$0xff]
      %v235 = vcombine.high %v231, %v231
      %v237 = vunpack.c.l.s4 1983009808
      %v238 = vunpack.c.0.s8 %v237
      %v239 = vlaneseq
      %v240 = vshrl.u32 %v239, 7
      %v241 = vsub.s32 %v238, %v240
      %v242 = vrot.slane %v231, %v241
      %v244 = vunpack.c.l.s4 1983009808
      %v245 = vunpack.c.0.s8 %v244
      %v246 = vlaneseq
      %v247 = vshrl.u32 %v246, 7
      %v248 = vsub.s32 %v245, %v247
      %v249 = vrot.slane %v235, %v248
      %v250 = vcombine.high %v242, %v242
      %v251 = vcombine.high %v249, %v249
      %v252 = vcombine.high %v232, %v232
      %v254 = vunpack.c.l.s4 1983009808
      %v255 = vunpack.c.0.s8 %v254
      %v256 = vlaneseq
      %v257 = vshrl.u32 %v256, 7
      %v258 = vsub.s32 %v255, %v257
      %v259 = vrot.slane %v232, %v258
      %v261 = vunpack.c.l.s4 1983009808
      %v262 = vunpack.c.0.s8 %v261
      %v263 = vlaneseq
      %v264 = vshrl.u32 %v263, 7
      %v265 = vsub.s32 %v262, %v264
      %v266 = vrot.slane %v252, %v265
      %v267 = vcombine.high %v259, %v259
      %v268 = vcombine.high %v266, %v266
      %vm277 = vcmask 1041408
      %v278 = vsel %vm277, %v242, 0.0
      %v279 = vsel %vm277, %v250, 0.0
      %v280 = vadd.f32 %v278, %v279
      %v281 = vsel %vm277, %v249, 0.0
      %v282 = vadd.f32 %v280, %v281
      %v283 = vsel %vm277, %v251, 0.0
      %v284 = vadd.f32 %v282, %v283
      %v285 = vsel %vm277, %v259, 0.0
      %v286 = vadd.f32 %v284, %v285
      %v287 = vsel %vm277, %v267, 0.0
      %v288 = vadd.f32 %v286, %v287
      %v289 = vsel %vm277, %v266, 0.0
      %v290 = vadd.f32 %v288, %v289
      %v291 = vsel %vm277, %v268, 0.0
      %v292 = vadd.f32 %v290, %v291
      %293 = vadd.xlane.f32.xlu0 %v292
      %v294 = vpop.xlane.xlu0 %293
      %v295 = vrot.slane %v294, 4
      %v296 = vadd.f32 %v294, %v295
      %v297 = vrot.slane %v296, 2
      %v298 = vadd.f32 %v296, %v297
      %v299 = vrot.slane %v298, 1
      %v300 = vadd.f32 %v298, %v299
      %s301 = vtos %v300
      %v302 = vstv %s301
      %303 = vst [vmem:[#allocation10] sm:$0xff] %v302
    $region25: #{tpu_custom_call.1} parent=1 // pred_fallthru
      _
    // Predicated region
    $region26: #{tpu_custom_call.1} parent=1 // pred_check
      _
    $region27: #{tpu_custom_call.1} parent=1 // pred_check_branch
      %305 = sbr.rel (0) target = $region29
    $region28: #{tpu_custom_call.1} parent=1 // pred_region
      %s307 = ssub.s32 128, 128
      %308 = vsyncadd [#allocation7], %s307
      %s310 = sshll.u32 [#allocation10], 4
      %s311 = int_to_ptr.vmem [resolvable:$true] %s310
      %313 = dma.vmem_to_hbm [thread:$0]  %s311, 128, %s3, [#allocation7]
    $region29: #{tpu_custom_call.1} parent=1 // pred_fallthru
      _
    // Predicated region
    $region30: #{tpu_custom_call.1} parent=1 // pred_check
      _
    $region31: #{tpu_custom_call.1} parent=1 // pred_check_branch
      %315 = sbr.rel (0) target = $region33
    $region32: #{tpu_custom_call.1} parent=1 // pred_region
      %316 = dma.done [#allocation7], 128
    $region33: #{tpu_custom_call.1} parent=1 // pred_fallthru
      _
    %317 = vsyncpa [#allocation6], 1
    %318 = vsyncpa [#allocation9], 1
    %319 = vsyncpa [#allocation7], 1

</llo_original>
